<compile_context>
chip_gen: v7x
topology: tpu7x:2x2x1
jax: 0.10.0
libtpu: 0.0.40
codegen_flags: <defaults>
</compile_context>

<pallas_src>
import functools

import jax
import jax.numpy as jnp
from jax.experimental import pallas as pl
from jax.experimental.pallas import tpu as pltpu


def _complement_entropy_kernel(logits_ref, labels_ref, out_ref, acc_ref,
                               *, batch, n_classes, block_rows):
    i = pl.program_id(0)

    @pl.when(i == 0)
    def _init():
        acc_ref[0] = 0.0

    # DMA'd in native dtype; cast to f32 on the VPU (free slack here).
    logits = logits_ref[...].astype(jnp.float32)       # (TB, C)
    labels = labels_ref[...]                            # (TB, 1) int32
    TB, C = logits.shape

    # Rows past the real batch (ragged last tile) get neutral logits so every
    # intermediate stays finite; their contributions are masked out below.
    row = jax.lax.broadcasted_iota(jnp.int32, (TB, 1), 0) + i * block_rows
    valid = row < batch                                 # (TB, 1) bool
    logits = jnp.where(valid, logits, 0.0)

    # Numerically-stable softmax / log-softmax over classes (axis=1).
    m = jnp.max(logits, axis=1, keepdims=True)
    z = logits - m
    e = jnp.exp(z)                                      # 1 transcendental / element
    s = jnp.sum(e, axis=1, keepdims=True)               # (TB, 1)
    inv_s = 1.0 / s                                     # per-row only
    log_s = jnp.log(s)                                  # per-row only
    p = e * inv_s                                       # softmax
    log_p = z - log_s                                   # log-softmax

    classes = jax.lax.broadcasted_iota(jnp.int32, (TB, C), 1)
    is_true = classes == labels                         # one-hot as predicate

    # Base loss contribution: sum of -log p[true class] over valid rows.
    base_sum = -jnp.sum(jnp.where(jnp.logical_and(valid, is_true), log_p, 0.0))

    # Complement-entropy contribution.
    p_gt = jnp.sum(jnp.where(is_true, p, 0.0), axis=1, keepdims=True)  # (TB,1)
    p_stable = 1.0 - p_gt + 1e-07
    inv_stable = 1.0 / p_stable                         # per-row only (exact)
    log_stable = jnp.log(p_stable)                      # per-row only
    px = p * inv_stable
    # log(px + 1e-10) ~= log_p - log(p_stable); avoids a per-element log.
    log_px = log_p - log_stable
    compl = jnp.where(jnp.logical_and(valid, jnp.logical_not(is_true)),
                      px * log_px, 0.0)
    compl_sum = jnp.sum(compl)

    acc_ref[0] += base_sum + compl_sum / (n_classes - 1)

    @pl.when(i == pl.num_programs(0) - 1)
    def _finalize():
        out_ref[0, 0] = acc_ref[0] / batch


def complement_entropy_loss(y_pred, y_true, *, block_rows=1024):
    """y_pred: (B, C) float logits; y_true: (B,) int class indices -> scalar."""
    B, C = y_pred.shape
    labels = y_true.reshape(B, 1).astype(jnp.int32)

    # Batch tile: cover the whole batch if small, otherwise a multiple of 8
    # rows sized so the double-buffered input tiles stay a few MiB (safe on
    # v5e's 16 MiB scoped default and v7x's 64 MiB physical VMEM).
    bytes_per_row = C * jnp.dtype(y_pred.dtype).itemsize
    vmem_rows = max(8, (4 * 1024 * 1024) // max(1, bytes_per_row))
    tb = min(B, block_rows, vmem_rows)
    if tb < B:
        tb = max(8, (tb // 8) * 8)
    grid = (pl.cdiv(B, tb),)

    kernel = functools.partial(_complement_entropy_kernel,
                               batch=B, n_classes=C, block_rows=tb)

    cost = pl.CostEstimate(
        flops=10 * B * C,
        transcendentals=B * C + 2 * B,
        bytes_accessed=B * C * jnp.dtype(y_pred.dtype).itemsize + B * 4 + 4,
    )

    # TODO(synk): on v7x a leading 2-wide "parallel" axis could shard the batch
    # across both TensorCores; kept single-core for portability/simplicity.
    out = pl.pallas_call(
        kernel,
        out_shape=jax.ShapeDtypeStruct((1, 1), jnp.float32),
        grid=grid,
        in_specs=[
            pl.BlockSpec((tb, C), lambda i: (i, 0)),
            pl.BlockSpec((tb, 1), lambda i: (i, 0)),
        ],
        out_specs=pl.BlockSpec((1, 1), lambda i: (0, 0),
                               memory_space=pltpu.MemorySpace.SMEM),
        scratch_shapes=[pltpu.SMEM((1,), jnp.float32)],
        compiler_params=pltpu.CompilerParams(
            dimension_semantics=("arbitrary",)),
        cost_estimate=cost,
    )(y_pred, labels)
    return out[0, 0]


def _reference(y_pred, y_true):
    # Pure-JAX reference matching the PyTorch module semantics.
    B, C = y_pred.shape
    log_p = jax.nn.log_softmax(y_pred.astype(jnp.float32), axis=1)
    p = jnp.exp(log_p)
    onehot = jax.nn.one_hot(y_true, C, dtype=jnp.float32)
    loss_base = -jnp.sum(onehot * log_p) / B
    p_gt = jnp.sum(onehot * p, axis=1, keepdims=True)
    px = p / (1.0 - p_gt + 1e-07)
    log_px = jnp.log(px + 1e-10)
    loss_compl = jnp.sum(px * log_px * (1.0 - onehot)) / B / (C - 1)
    return loss_base + loss_compl


if __name__ == "__main__":
    key = jax.random.PRNGKey(0)

    # Case 1: module-spec sized inputs (B=2, C=4) -> single-tile path.
    k1, k2, k3, k4 = jax.random.split(key, 4)
    B, C = 2, 4
    y_pred = jax.random.normal(k1, (B, C), dtype=jnp.float32)
    y_true = jax.random.randint(k2, (B,), 0, C, dtype=jnp.int32)
    loss = complement_entropy_loss(y_pred, y_true)
    jax.block_until_ready(loss)
    ref = _reference(y_pred, y_true)
    assert jnp.allclose(loss, ref, atol=1e-5, rtol=1e-5), (loss, ref)

    # Case 2: multi-tile + ragged tail path (B=20, 8-row tiles -> grid of 3).
    B2, C2 = 20, 4
    y_pred2 = jax.random.normal(k3, (B2, C2), dtype=jnp.float32)
    y_true2 = jax.random.randint(k4, (B2,), 0, C2, dtype=jnp.int32)
    loss2 = complement_entropy_loss(y_pred2, y_true2, block_rows=8)
    jax.block_until_ready(loss2)
    ref2 = _reference(y_pred2, y_true2)
    assert jnp.allclose(loss2, ref2, atol=1e-5, rtol=1e-5), (loss2, ref2)

    print("KERNEL_OK")
</pallas_src>

<mosaic_0001>
module attributes {stable_mosaic.version = 11 : i64} {
  func.func @_complement_entropy_kernel(%arg0: i32, %arg1: memref<2x4xf32, #tpu.memory_space<vmem>>, %arg2: memref<2x1xi32, #tpu.memory_space<vmem>>, %arg3: memref<1x1xf32, #tpu.memory_space<smem>>, %arg4: memref<1xf32, #tpu.memory_space<smem>>) attributes {dimension_semantics = [#tpu.dimension_semantics<arbitrary>], iteration_bounds = array<i64: 1>, scalar_prefetch = 0 : i64, scratch_operands = 1 : i64, tpu.core_type = #tpu.core_type<tc>, window_params = [{transform_indices = @transform_0, window_bounds = array<i64: 2, 4>}, {transform_indices = @transform_1, window_bounds = array<i64: 2, 1>}, {transform_indices = @transform_2, window_bounds = array<i64: 1, 1>}]} {
    %c0_i32 = arith.constant 0 : i32
    %0 = arith.cmpi eq, %arg0, %c0_i32 : i32
    %1 = arith.extui %0 : i1 to i32
    %c0_i32_0 = arith.constant 0 : i32
    %2 = arith.cmpi ne, %1, %c0_i32_0 : i32
    scf.if %2 {
      %cst_24 = arith.constant 0.000000e+00 : f32
      %c0_25 = arith.constant 0 : index
      %74 = memref.load %arg4[%c0_25] : memref<1xf32, #tpu.memory_space<smem>>
      memref.store %cst_24, %arg4[%c0_25] : memref<1xf32, #tpu.memory_space<smem>>
    } else {
    }
    %c0 = arith.constant 0 : index
    %c0_1 = arith.constant 0 : index
    %3 = vector.load %arg1[%c0, %c0_1] : memref<2x4xf32, #tpu.memory_space<vmem>>, vector<2x4xf32>
    %c0_2 = arith.constant 0 : index
    %c0_3 = arith.constant 0 : index
    %4 = vector.load %arg2[%c0_2, %c0_3] : memref<2x1xi32, #tpu.memory_space<vmem>>, vector<2x1xi32>
    %5 = tpu.iota {dimensions = array<i32: 0>} : vector<2x1xi32>
    %c2_i32 = arith.constant 2 : i32
    %6 = arith.muli %arg0, %c2_i32 : i32
    %7 = vector.broadcast %6 : i32 to vector<2x1xi32>
    %8 = arith.addi %5, %7 : vector<2x1xi32>
    %c2_i32_4 = arith.constant 2 : i32
    %9 = vector.broadcast %c2_i32_4 : i32 to vector<2x1xi32>
    %10 = arith.cmpi slt, %8, %9 : vector<2x1xi32>
    %cst = arith.constant 0.000000e+00 : f32
    %11 = vector.shape_cast %10 : vector<2x1xi1> to vector<2x1xi1>
    %12 = vector.broadcast %11 : vector<2x1xi1> to vector<2x4xi1>
    %13 = vector.broadcast %cst : f32 to vector<2x4xf32>
    %14 = arith.select %12, %3, %13 : vector<2x4xi1>, vector<2x4xf32>
    %cst_5 = arith.constant dense<0xFF800000> : vector<2xf32>
    %15 = vector.multi_reduction <maximumf>, %14, %cst_5 [1] : vector<2x4xf32> to vector<2xf32>
    %16 = vector.shape_cast %15 : vector<2xf32> to vector<2x1xf32>
    %17 = vector.broadcast %16 : vector<2x1xf32> to vector<2x4xf32>
    %18 = arith.subf %14, %17 : vector<2x4xf32>
    %19 = math.exp %18 : vector<2x4xf32>
    %cst_6 = arith.constant dense<0.000000e+00> : vector<2xf32>
    %20 = vector.multi_reduction <add>, %19, %cst_6 [1] : vector<2x4xf32> to vector<2xf32>
    %21 = vector.shape_cast %20 : vector<2xf32> to vector<2x1xf32>
    %cst_7 = arith.constant 1.000000e+00 : f32
    %22 = vector.broadcast %cst_7 : f32 to vector<2x1xf32>
    %23 = arith.divf %22, %21 : vector<2x1xf32>
    %24 = math.log %21 : vector<2x1xf32>
    %25 = vector.broadcast %23 : vector<2x1xf32> to vector<2x4xf32>
    %26 = arith.mulf %19, %25 : vector<2x4xf32>
    %27 = vector.broadcast %24 : vector<2x1xf32> to vector<2x4xf32>
    %28 = arith.subf %18, %27 : vector<2x4xf32>
    %29 = tpu.iota {dimensions = array<i32: 1>} : vector<2x4xi32>
    %30 = vector.broadcast %4 : vector<2x1xi32> to vector<2x4xi32>
    %31 = arith.cmpi eq, %29, %30 : vector<2x4xi32>
    %32 = vector.broadcast %10 : vector<2x1xi1> to vector<2x4xi1>
    %33 = arith.andi %32, %31 : vector<2x4xi1>
    %cst_8 = arith.constant 0.000000e+00 : f32
    %34 = vector.broadcast %cst_8 : f32 to vector<2x4xf32>
    %35 = arith.select %33, %28, %34 : vector<2x4xi1>, vector<2x4xf32>
    %36 = vector.shape_cast %35 : vector<2x4xf32> to vector<1x2x4xf32>
    %cst_9 = arith.constant dense<0.000000e+00> : vector<1xf32>
    %37 = vector.multi_reduction <add>, %36, %cst_9 [1, 2] : vector<1x2x4xf32> to vector<1xf32>
    %38 = vector.shape_cast %37 : vector<1xf32> to vector<1x1x1xf32>
    %39 = vector.extract %38[0, 0, 0] : f32 from vector<1x1x1xf32>
    %cst_10 = arith.constant 0.000000e+00 : f32
    %40 = arith.subf %cst_10, %39 : f32
    %cst_11 = arith.constant 0.000000e+00 : f32
    %41 = vector.broadcast %cst_11 : f32 to vector<2x4xf32>
    %42 = arith.select %31, %26, %41 : vector<2x4xi1>, vector<2x4xf32>
    %cst_12 = arith.constant dense<0.000000e+00> : vector<2xf32>
    %43 = vector.multi_reduction <add>, %42, %cst_12 [1] : vector<2x4xf32> to vector<2xf32>
    %44 = vector.shape_cast %43 : vector<2xf32> to vector<2x1xf32>
    %cst_13 = arith.constant 1.000000e+00 : f32
    %45 = vector.broadcast %cst_13 : f32 to vector<2x1xf32>
    %46 = arith.subf %45, %44 : vector<2x1xf32>
    %cst_14 = arith.constant 1.000000e-07 : f32
    %47 = vector.broadcast %cst_14 : f32 to vector<2x1xf32>
    %48 = arith.addf %46, %47 : vector<2x1xf32>
    %cst_15 = arith.constant 1.000000e+00 : f32
    %49 = vector.broadcast %cst_15 : f32 to vector<2x1xf32>
    %50 = arith.divf %49, %48 : vector<2x1xf32>
    %51 = math.log %48 : vector<2x1xf32>
    %52 = vector.broadcast %50 : vector<2x1xf32> to vector<2x4xf32>
    %53 = arith.mulf %26, %52 : vector<2x4xf32>
    %54 = vector.broadcast %51 : vector<2x1xf32> to vector<2x4xf32>
    %55 = arith.subf %28, %54 : vector<2x4xf32>
    %cst_16 = arith.constant dense<true> : vector<2x4xi1>
    %56 = arith.xori %31, %cst_16 : vector<2x4xi1>
    %57 = vector.broadcast %10 : vector<2x1xi1> to vector<2x4xi1>
    %58 = arith.andi %57, %56 : vector<2x4xi1>
    %59 = arith.mulf %53, %55 : vector<2x4xf32>
    %cst_17 = arith.constant 0.000000e+00 : f32
    %60 = vector.broadcast %cst_17 : f32 to vector<2x4xf32>
    %61 = arith.select %58, %59, %60 : vector<2x4xi1>, vector<2x4xf32>
    %62 = vector.shape_cast %61 : vector<2x4xf32> to vector<1x2x4xf32>
    %cst_18 = arith.constant dense<0.000000e+00> : vector<1xf32>
    %63 = vector.multi_reduction <add>, %62, %cst_18 [1, 2] : vector<1x2x4xf32> to vector<1xf32>
    %64 = vector.shape_cast %63 : vector<1xf32> to vector<1x1x1xf32>
    %65 = vector.extract %64[0, 0, 0] : f32 from vector<1x1x1xf32>
    %c0_19 = arith.constant 0 : index
    %66 = memref.load %arg4[%c0_19] : memref<1xf32, #tpu.memory_space<smem>>
    %cst_20 = arith.constant 3.000000e+00 : f32
    %67 = arith.divf %65, %cst_20 : f32
    %68 = arith.addf %40, %67 : f32
    %69 = arith.addf %66, %68 : f32
    %c0_21 = arith.constant 0 : index
    %70 = memref.load %arg4[%c0_21] : memref<1xf32, #tpu.memory_space<smem>>
    memref.store %69, %arg4[%c0_21] : memref<1xf32, #tpu.memory_space<smem>>
    %c0_i32_22 = arith.constant 0 : i32
    %71 = arith.cmpi eq, %arg0, %c0_i32_22 : i32
    %72 = arith.extui %71 : i1 to i32
    %c0_i32_23 = arith.constant 0 : i32
    %73 = arith.cmpi ne, %72, %c0_i32_23 : i32
    scf.if %73 {
      %c0_24 = arith.constant 0 : index
      %74 = memref.load %arg4[%c0_24] : memref<1xf32, #tpu.memory_space<smem>>
      %cst_25 = arith.constant 2.000000e+00 : f32
      %75 = arith.divf %74, %cst_25 : f32
      %c0_26 = arith.constant 0 : index
      %c0_27 = arith.constant 0 : index
      %76 = memref.load %arg3[%c0_26, %c0_27] : memref<1x1xf32, #tpu.memory_space<smem>>
      memref.store %75, %arg3[%c0_26, %c0_27] : memref<1x1xf32, #tpu.memory_space<smem>>
    } else {
    }
    return
  }
  func.func @transform_0(%arg0: i32) -> (i32, i32) {
    %c0_i32 = arith.constant 0 : i32
    %c0_i32_0 = arith.constant 0 : i32
    return %arg0, %c0_i32 : i32, i32
  }
  func.func @transform_1(%arg0: i32) -> (i32, i32) {
    %c0_i32 = arith.constant 0 : i32
    %c0_i32_0 = arith.constant 0 : i32
    return %arg0, %c0_i32 : i32, i32
  }
  func.func @transform_2(%arg0: i32) -> (i32, i32) {
    %c0_i32 = arith.constant 0 : i32
    %c0_i32_0 = arith.constant 0 : i32
    %c0_i32_1 = arith.constant 0 : i32
    return %c0_i32, %c0_i32_0 : i32, i32
  }
}

</mosaic_0001>

<llo_original>
// kernel: tpu_custom_call.1
$region0: #{tpu_custom_call.1}
  #allocation0 [shape = 'u32[]', space=smem, size = 0x4, offset = 0x4, fixed_abs, tag = 'smem constant byte address 0x4 - core index']
  #allocation1 [shape = 'u32[144,128]{1,0:T(1,128)}', space=vmem, size = 0x12000, scoped, tag = 'internal scratch']
  #allocation2 [shape = 'f32[1]{0:T(128)}', space=smem, size = 0x200, scoped, tag = 'scratch operand']
  %s0 = inlined_call_operand.vmem [shape: f32[2,4], index: 0, kind: input, shape index: {}]
  %s1 = inlined_call_operand.vmem [shape: s32[2,1], index: 1, kind: input, shape index: {}]
  %s2 = inlined_call_operand.hbm [shape: f32[1,1], index: 2, kind: output, shape index: {}]
  %s3 = sld [smem:[#allocation0]]
  $region26: #{tpu_custom_call.1} parent=0
    _
  %s5 = ssub.s32 1, %s3
  %s6 = scalar_select 0, %s5, %s3
  $region1: #{tpu_custom_call.1} parent=0
    #allocation3 [shape = 'u8[512]{0}', space=smem, size = 0x200, scoped, tag = 'output window, operand 0, single buffered']
    #allocation4 [shape = 's32[1]{0}', space=sflag, size = 0x4, scoped, tag = 'scoped memory for tpu_custom_call.1']
    %7 = vsyncpa [#allocation4], 0
    // Predicated region
    $region2: #{tpu_custom_call.1} parent=1 // pred_check
      _
    $region3: #{tpu_custom_call.1} parent=1 // pred_check_branch
      %9 = sbr.rel (0) target = $region5
    $region4: #{tpu_custom_call.1} parent=1 // pred_region
      _
    $region5: #{tpu_custom_call.1} parent=1 // pred_fallthru
      _
    // Predicated region
    $region6: #{tpu_custom_call.1} parent=1 // pred_check
      _
    $region7: #{tpu_custom_call.1} parent=1 // pred_check_branch
      %11 = sbr.rel (0) target = $region9
    $region8: #{tpu_custom_call.1} parent=1 // pred_region
      _
    $region9: #{tpu_custom_call.1} parent=1 // pred_fallthru
      _
    %p12 = scmp.eq.s32.totalorder 0, 0
    // Predicated region
    $region10: #{tpu_custom_call.1} parent=1 // pred_check
      %p13 = pneg %p12
    $region11: #{tpu_custom_call.1} parent=1 // pred_check_branch
      %15 = sbr.rel (%p13) target = $region13
    $region12: #{tpu_custom_call.1} parent=1 // pred_region
      %s16 = scalar_lea.smem [#allocation2], 0
      %17 = sst [smem:[%s16]] 0.0
    $region13: #{tpu_custom_call.1} parent=1 // pred_fallthru
      _
    %v18 = vld [vmem:[%s0] sm:$0x3]
    %v19 = vld [vmem:[%s1] sm:$0x3]
    %v20 = vlaneseq
    %v21 = vshrl.u32 %v20, 7
    %s22 = smul.u32 0, 2
    %v23 = vstv %s22
    %v24 = vadd.s32 %v21, %v23
    %vm25 = vcmp.lt.s32.totalorder %v24, 2
    %v26 = vsel %vm25, 1, 0
    %vm27 = vcmp.eq.s32.totalorder %v26, 1
    %v28 = vsel %vm27, %v18, 0.0
    %vm29 = vcmask 25600
    %v30 = vsel %vm29, %v28, -inf
    %31 = vmax.xlane.f32.xlu0 %v30
    %v32 = vpop.xlane.xlu0 %31
    %v33 = vsub.f32 %v28, %v32
    %v34 = vmul.f32 %v33, 1.442695
    %v35 = vpow.pop %v34
    %v36 = vsel %vm29, %v35, 0.0
    %37 = vadd.xlane.f32.xlu0 %v36
    %v38 = vpop.xlane.xlu0 %37
    %v39 = vrcp.pop %v38
    %v40 = vmul.f32 1.0, %v39
    %v41 = vlog2.pop %v38
    %v42 = vmul.f32 %v41, 0.6931472
    %v43 = vmul.f32 %v35, %v40
    %v44 = vsub.f32 %v33, %v42
    %v45 = vlaneseq
    %v46 = vand.u32 %v45, 127
    %47 = vset.pattern.permute.xlu0 0
    %48 = vperm.xlu0 %47, %v19
    %v49 = vpop.permute.xlu0 %48
    %vm50 = vcmp.eq.s32.totalorder %v46, %v49
    %vm51 = vmand %vm27, %vm50
    %v52 = vsel %vm51, %v44, 0.0
    %v53 = vsel %vm29, %v52, 0.0
    %54 = vadd.xlane.f32.xlu0 %v53
    %v55 = vpop.xlane.xlu0 %54
    %v56 = vrot.slane %v55, 4
    %v57 = vadd.f32 %v55, %v56
    %v58 = vrot.slane %v57, 2
    %v59 = vadd.f32 %v57, %v58
    %v60 = vrot.slane %v59, 1
    %v61 = vadd.f32 %v59, %v60
    %s62 = vtos %v61
    %s63 = ssub.f32 0.0, %s62
    %v64 = vsel %vm50, %v43, 0.0
    %v65 = vsel %vm29, %v64, 0.0
    %66 = vadd.xlane.f32.xlu0 %v65
    %v67 = vpop.xlane.xlu0 %66
    %v68 = vsub.f32 1.0, %v67
    %v69 = vadd.f32 %v68, 1e-07
    %v70 = vrcp.pop %v69
    %v71 = vmul.f32 1.0, %v70
    %v72 = vlog2.pop %v69
    %v73 = vmul.f32 %v72, 0.6931472
    %v74 = vmul.f32 %v43, %v71
    %v75 = vsub.f32 %v44, %v73
    %vm76 = vmxor %vm50, 1
    %vm77 = vmand %vm27, %vm76
    %v78 = vmul.f32 %v74, %v75
    %v79 = vsel %vm77, %v78, 0.0
    %v80 = vsel %vm29, %v79, 0.0
    %81 = vadd.xlane.f32.xlu0 %v80
    %v82 = vpop.xlane.xlu0 %81
    %v83 = vrot.slane %v82, 4
    %v84 = vadd.f32 %v82, %v83
    %v85 = vrot.slane %v84, 2
    %v86 = vadd.f32 %v84, %v85
    %v87 = vrot.slane %v86, 1
    %v88 = vadd.f32 %v86, %v87
    %s89 = vtos %v88
    %s90 = sld [smem:[#allocation2]]
    %v91 = vrcp.pop 3.0
    %s92 = vtos %v91
    %s93 = smul.f32 %s89, %s92
    %s94 = sadd.f32 %s63, %s93
    %s95 = sadd.f32 %s90, %s94
    %s96 = scalar_lea.smem [#allocation2], 0
    %97 = sst [smem:[%s96]] %s95
    // Predicated region
    $region14: #{tpu_custom_call.1} parent=1 // pred_check
      %p98 = pneg %p12
    $region15: #{tpu_custom_call.1} parent=1 // pred_check_branch
      %100 = sbr.rel (%p98) target = $region17
    $region16: #{tpu_custom_call.1} parent=1 // pred_region
      %s101 = sld [smem:[#allocation2]]
      %v102 = vrcp.pop 2.0
      %s103 = vtos %v102
      %s104 = smul.f32 %s101, %s103
      %s105 = scalar_lea.smem [#allocation3], 0
      %106 = sst [smem:[%s105]] %s104
    $region17: #{tpu_custom_call.1} parent=1 // pred_fallthru
      _
    // Predicated region
    $region18: #{tpu_custom_call.1} parent=1 // pred_check
      _
    $region19: #{tpu_custom_call.1} parent=1 // pred_check_branch
      %108 = sbr.rel (0) target = $region21
    $region20: #{tpu_custom_call.1} parent=1 // pred_region
      %s110 = ssub.s32 16, 16
      %111 = vsyncadd [#allocation4], %s110
      %114 = dma.smem_to_hbm [#allocation3], 16, %s2, [#allocation4]
    $region21: #{tpu_custom_call.1} parent=1 // pred_fallthru
      _
    // Predicated region
    $region22: #{tpu_custom_call.1} parent=1 // pred_check
      _
    $region23: #{tpu_custom_call.1} parent=1 // pred_check_branch
      %116 = sbr.rel (0) target = $region25
    $region24: #{tpu_custom_call.1} parent=1 // pred_region
      %117 = dma.done [#allocation4], 16
    $region25: #{tpu_custom_call.1} parent=1 // pred_fallthru
      _
    %118 = sfence
    %119 = vsyncpa [#allocation4], 1

</llo_original>
